<compile_context>
chip_gen: v5e
topology: v5e:2x2
jax: 0.10.0
libtpu: 0.0.40
codegen_flags: <defaults>
</compile_context>

<pallas_src>
import jax
import jax.numpy as jnp
from jax.experimental import pallas as pl
from jax.experimental.pallas import tpu as pltpu

LANE = 128  # TPU lane width


def _round_up(n, m):
    return ((n + m - 1) // m) * m


def _pick_tb(b8, target=1024):
    """Largest multiple-of-8 divisor of b8 that is <= cap.

    cap enforces at least 2 grid steps when the batch allows it (v7x has two
    TensorCores; a 1-step 'parallel' axis leaves one idle). Divisor choice
    avoids padding almost a full batch tile at awkward batch sizes.
    """
    cap = min(target, b8)
    if b8 >= 16:
        cap = min(cap, b8 // 2)
    n = b8 // 8
    best = 1
    for d in range(1, n + 1):
        if n % d == 0 and 8 * d <= cap:
            best = d
    return 8 * best


# ---------------------------------------------------------------------------
# Kernel: 4 dependent matmuls (input, middle x2, folded tail).
# MXU operand dtype = weight dtype (bf16 in production, f32 for validation);
# accumulation is always f32; tanh is f32 (EUP slot, v5e-safe).
# ---------------------------------------------------------------------------
def mlp_kernel(x_ref,
               w1_ref, b1_ref,
               w2_ref, b2_ref,
               w34_ref, b34_ref,
               o_ref):
    mxu_dtype = w1_ref.dtype

    # input layer + tanh: (TB, 32) x (32, 128) -> (TB, 128)
    h = jnp.tanh(
        jnp.dot(x_ref[...].astype(mxu_dtype), w1_ref[...],
                preferred_element_type=jnp.float32)
        + b1_ref[...]
    )

    # middle layer applied twice with the SAME weights; load w2/b2 once.
    # b2 is a (1, 128) row - the VPU broadcast across sublanes in the add is
    # cheap, so no materialized (TB, 128) broadcast temp.
    w2 = w2_ref[...]
    b2 = b2_ref[...]
    for _ in range(2):
        h = jnp.tanh(
            jnp.dot(h.astype(mxu_dtype), w2,
                    preferred_element_type=jnp.float32) + b2
        )

    # folded (lasthiddenlayer @ outputlayer): (TB, 128) x (128, 8) -> (TB, 8),
    # stored straight into the unpadded output block.
    o_ref[...] = (
        jnp.dot(h.astype(mxu_dtype), w34_ref[...],
                preferred_element_type=jnp.float32)
        + b34_ref[...]
    ).astype(o_ref.dtype)


# ---------------------------------------------------------------------------
# Parameter prep: fold the two activation-free tail layers, zero-pad ONLY the
# hidden dim up to 128 lanes (input dim 32 and output dim 8 stay unpadded),
# and cast weights to the requested MXU operand dtype. Done once.
# ---------------------------------------------------------------------------
def prepare_params(p, mxu_dtype=jnp.bfloat16):
    w34 = p["w3"] @ p["w4"]              # (H, D_out), folded in f32
    b34 = p["b3"] @ p["w4"] + p["b4"]    # (1, D_out)

    D_in, H = p["w1"].shape
    D_out = p["w4"].shape[1]
    Hp = _round_up(H, LANE)

    def pad2(a, rows, cols):
        return jnp.pad(a, ((0, rows - a.shape[0]), (0, cols - a.shape[1])))

    return {
        # weights in MXU operand dtype; biases stay f32 (added to f32 accum).
        "w1": pad2(p["w1"], D_in, Hp).astype(mxu_dtype),
        "b1": pad2(p["b1"], 1, Hp),
        "w2": pad2(p["w2"], Hp, Hp).astype(mxu_dtype),
        "b2": pad2(p["b2"], 1, Hp),
        "w34": pad2(w34, Hp, D_out).astype(mxu_dtype),
        "b34": b34,
        "d_in": D_in,
        "d_out": D_out,
    }


# ---------------------------------------------------------------------------
# Wrapper: batch-tiled grid; weights mapped to block (0,0) every step so they
# stay resident in VMEM; input/output blocks are the true (unpadded) widths.
# ---------------------------------------------------------------------------
def net_forward(x, prep, *, tb_target=1024):
    B, D_in = x.shape
    assert D_in == prep["d_in"]
    Hp = prep["w2"].shape[0]
    d_out = prep["d_out"]

    # Pad batch only up to a multiple of 8 sublanes; TB is a divisor of that.
    B8 = _round_up(B, 8)
    TB = _pick_tb(B8, tb_target)
    xp = x if B8 == B else jnp.pad(x, ((0, B8 - B), (0, 0)))

    def resident(a):
        # Same block every grid step -> DMA'd once, stays resident in VMEM.
        return pl.BlockSpec(a.shape, lambda i: (0, 0))

    flops = 2 * B8 * (D_in * Hp + 2 * Hp * Hp + Hp * d_out)
    transcendentals = 3 * B8 * Hp
    bytes_accessed = int(
        xp.size * xp.dtype.itemsize
        + sum(prep[k].size * prep[k].dtype.itemsize
              for k in ("w1", "b1", "w2", "b2", "w34", "b34"))
        + B8 * d_out * 4
    )

    out = pl.pallas_call(
        mlp_kernel,
        out_shape=jax.ShapeDtypeStruct((B8, d_out), jnp.float32),
        grid=(B8 // TB,),
        in_specs=[
            # last block dim == full array dim (32), so no lane padding needed
            pl.BlockSpec((TB, D_in), lambda i: (i, 0)),
            resident(prep["w1"]), resident(prep["b1"]),
            resident(prep["w2"]), resident(prep["b2"]),
            resident(prep["w34"]), resident(prep["b34"]),
        ],
        # output block is the true width (8); contiguous in HBM
        out_specs=pl.BlockSpec((TB, d_out), lambda i: (i, 0)),
        compiler_params=pltpu.CompilerParams(
            dimension_semantics=("parallel",),
            vmem_limit_bytes=32 * 1024 * 1024),
        cost_estimate=pl.CostEstimate(
            flops=flops,
            transcendentals=transcendentals,
            bytes_accessed=bytes_accessed),
    )(xp, prep["w1"], prep["b1"], prep["w2"], prep["b2"],
      prep["w34"], prep["b34"])

    return out if B8 == B else out[:B]


# ---------------------------------------------------------------------------
# Deterministic init mimicking nn.Linear's U(-1/sqrt(fan_in), +1/sqrt(fan_in)).
# Weights are stored already transposed to (in_features, out_features).
# ---------------------------------------------------------------------------
def init_params(key, D_in, H, D, D_out):
    keys = jax.random.split(key, 8)

    def linear(kw, kb, fan_in, fan_out):
        bound = 1.0 / jnp.sqrt(jnp.float32(fan_in))
        w = jax.random.uniform(kw, (fan_in, fan_out), jnp.float32, -bound, bound)
        b = jax.random.uniform(kb, (1, fan_out), jnp.float32, -bound, bound)
        return w, b

    w1, b1 = linear(keys[0], keys[1], D_in, H)
    w2, b2 = linear(keys[2], keys[3], H, H)
    w3, b3 = linear(keys[4], keys[5], H, D)
    w4, b4 = linear(keys[6], keys[7], D, D_out)
    return {"w1": w1, "b1": b1, "w2": w2, "b2": b2,
            "w3": w3, "b3": b3, "w4": w4, "b4": b4}


def reference_forward(x, p):
    h = jnp.tanh(x @ p["w1"] + p["b1"])
    for _ in range(2):
        h = jnp.tanh(h @ p["w2"] + p["b2"])
    phi = h @ p["w3"] + p["b3"]
    return phi @ p["w4"] + p["b4"]


if __name__ == "__main__":
    B, D_in, H, D, D_out = 8, 32, 32, 16, 8

    key = jax.random.PRNGKey(0)
    kx, kp = jax.random.split(key)
    x = jax.random.normal(kx, (B, D_in), jnp.float32)
    params = init_params(kp, D_in, H, D, D_out)
    y_ref = reference_forward(x, params)

    # 1) bit-tight validation path: f32 MXU operands.
    y_f32 = jax.block_until_ready(net_forward(x, prepare_params(params, jnp.float32)))
    assert y_f32.shape == (B, D_out)
    # The W3@W4 fold changes f32 rounding by ~1e-7; well inside tolerance.
    assert jnp.allclose(y_f32, y_ref, atol=1e-5, rtol=1e-4), "f32 path mismatch"

    # 2) production path: bf16 MXU operands (v6e/v7x MXU headroom; still fine
    #    on v5e), f32 accumulation and f32 tanh. Looser tolerance per review.
    y_bf16 = jax.block_until_ready(net_forward(x, prepare_params(params, jnp.bfloat16)))
    assert y_bf16.shape == (B, D_out)
    assert jnp.allclose(y_bf16, y_ref, atol=5e-2, rtol=5e-2), "bf16 path mismatch"

    print("KERNEL_OK")
</pallas_src>

<mosaic_0001>
module attributes {stable_mosaic.version = 11 : i64} {
  func.func @mlp_kernel(%arg0: i32, %arg1: memref<8x32xf32, #tpu.memory_space<vmem>>, %arg2: memref<32x128xf32, #tpu.memory_space<vmem>>, %arg3: memref<1x128xf32, #tpu.memory_space<vmem>>, %arg4: memref<128x128xf32, #tpu.memory_space<vmem>>, %arg5: memref<1x128xf32, #tpu.memory_space<vmem>>, %arg6: memref<128x8xf32, #tpu.memory_space<vmem>>, %arg7: memref<1x8xf32, #tpu.memory_space<vmem>>, %arg8: memref<8x8xf32, #tpu.memory_space<vmem>>) attributes {dimension_semantics = [#tpu.dimension_semantics<parallel>], iteration_bounds = array<i64: 1>, scalar_prefetch = 0 : i64, scratch_operands = 0 : i64, tpu.core_type = #tpu.core_type<tc>, window_params = [{transform_indices = @transform_0, window_bounds = array<i64: 8, 32>}, {pipeline_mode = #tpu.pipeline_mode<synchronous>, transform_indices = @transform_1, window_bounds = array<i64: 32, 128>}, {pipeline_mode = #tpu.pipeline_mode<synchronous>, transform_indices = @transform_2, window_bounds = array<i64: 1, 128>}, {pipeline_mode = #tpu.pipeline_mode<synchronous>, transform_indices = @transform_3, window_bounds = array<i64: 128, 128>}, {pipeline_mode = #tpu.pipeline_mode<synchronous>, transform_indices = @transform_4, window_bounds = array<i64: 1, 128>}, {pipeline_mode = #tpu.pipeline_mode<synchronous>, transform_indices = @transform_5, window_bounds = array<i64: 128, 8>}, {pipeline_mode = #tpu.pipeline_mode<synchronous>, transform_indices = @transform_6, window_bounds = array<i64: 1, 8>}, {transform_indices = @transform_7, window_bounds = array<i64: 8, 8>}]} {
    %c0 = arith.constant 0 : index
    %c0_0 = arith.constant 0 : index
    %0 = vector.load %arg1[%c0, %c0_0] : memref<8x32xf32, #tpu.memory_space<vmem>>, vector<8x32xf32>
    %c0_1 = arith.constant 0 : index
    %c0_2 = arith.constant 0 : index
    %1 = vector.load %arg2[%c0_1, %c0_2] : memref<32x128xf32, #tpu.memory_space<vmem>>, vector<32x128xf32>
    %cst = arith.constant dense<0.000000e+00> : vector<8x128xf32>
    %2 = tpu.matmul %0, %1, %cst {dimension_numbers = #tpu.dot_dimension_numbers<[1], [0], [0], [1], [0, 0, 1, 1], [], []>} : vector<8x32xf32>, vector<32x128xf32>, vector<8x128xf32> -> vector<8x128xf32>
    %c0_3 = arith.constant 0 : index
    %c0_4 = arith.constant 0 : index
    %3 = vector.load %arg3[%c0_3, %c0_4] : memref<1x128xf32, #tpu.memory_space<vmem>>, vector<1x128xf32>
    %4 = vector.broadcast %3 : vector<1x128xf32> to vector<8x128xf32>
    %5 = arith.addf %2, %4 : vector<8x128xf32>
    %6 = math.tanh %5 : vector<8x128xf32>
    %c0_5 = arith.constant 0 : index
    %c0_6 = arith.constant 0 : index
    %7 = vector.load %arg4[%c0_5, %c0_6] : memref<128x128xf32, #tpu.memory_space<vmem>>, vector<128x128xf32>
    %c0_7 = arith.constant 0 : index
    %c0_8 = arith.constant 0 : index
    %8 = vector.load %arg5[%c0_7, %c0_8] : memref<1x128xf32, #tpu.memory_space<vmem>>, vector<1x128xf32>
    %cst_9 = arith.constant dense<0.000000e+00> : vector<8x128xf32>
    %9 = tpu.matmul %6, %7, %cst_9 {dimension_numbers = #tpu.dot_dimension_numbers<[1], [0], [0], [1], [0, 0, 1, 1], [], []>} : vector<8x128xf32>, vector<128x128xf32>, vector<8x128xf32> -> vector<8x128xf32>
    %10 = vector.broadcast %8 : vector<1x128xf32> to vector<8x128xf32>
    %11 = arith.addf %9, %10 : vector<8x128xf32>
    %12 = math.tanh %11 : vector<8x128xf32>
    %cst_10 = arith.constant dense<0.000000e+00> : vector<8x128xf32>
    %13 = tpu.matmul %12, %7, %cst_10 {dimension_numbers = #tpu.dot_dimension_numbers<[1], [0], [0], [1], [0, 0, 1, 1], [], []>} : vector<8x128xf32>, vector<128x128xf32>, vector<8x128xf32> -> vector<8x128xf32>
    %14 = vector.broadcast %8 : vector<1x128xf32> to vector<8x128xf32>
    %15 = arith.addf %13, %14 : vector<8x128xf32>
    %16 = math.tanh %15 : vector<8x128xf32>
    %c0_11 = arith.constant 0 : index
    %c0_12 = arith.constant 0 : index
    %17 = vector.load %arg6[%c0_11, %c0_12] : memref<128x8xf32, #tpu.memory_space<vmem>>, vector<128x8xf32>
    %cst_13 = arith.constant dense<0.000000e+00> : vector<8x8xf32>
    %18 = tpu.matmul %16, %17, %cst_13 {dimension_numbers = #tpu.dot_dimension_numbers<[1], [0], [0], [1], [0, 0, 1, 1], [], []>} : vector<8x128xf32>, vector<128x8xf32>, vector<8x8xf32> -> vector<8x8xf32>
    %c0_14 = arith.constant 0 : index
    %c0_15 = arith.constant 0 : index
    %19 = vector.load %arg7[%c0_14, %c0_15] : memref<1x8xf32, #tpu.memory_space<vmem>>, vector<1x8xf32>
    %20 = vector.broadcast %19 : vector<1x8xf32> to vector<8x8xf32>
    %21 = arith.addf %18, %20 : vector<8x8xf32>
    %c0_16 = arith.constant 0 : index
    %c0_17 = arith.constant 0 : index
    %22 = vector.load %arg8[%c0_16, %c0_17] : memref<8x8xf32, #tpu.memory_space<vmem>>, vector<8x8xf32>
    tpu.vector_store %arg8[%c0_16, %c0_17], %21 {strides = array<i32>} : memref<8x8xf32, #tpu.memory_space<vmem>>, vector<8x8xf32>,
    return
  }
  func.func @transform_0(%arg0: i32) -> (i32, i32) {
    %c0_i32 = arith.constant 0 : i32
    %c0_i32_0 = arith.constant 0 : i32
    return %arg0, %c0_i32 : i32, i32
  }
  func.func @transform_1(%arg0: i32) -> (i32, i32) {
    %c0_i32 = arith.constant 0 : i32
    %c0_i32_0 = arith.constant 0 : i32
    %c0_i32_1 = arith.constant 0 : i32
    return %c0_i32, %c0_i32_0 : i32, i32
  }
  func.func @transform_2(%arg0: i32) -> (i32, i32) {
    %c0_i32 = arith.constant 0 : i32
    %c0_i32_0 = arith.constant 0 : i32
    %c0_i32_1 = arith.constant 0 : i32
    return %c0_i32, %c0_i32_0 : i32, i32
  }
  func.func @transform_3(%arg0: i32) -> (i32, i32) {
    %c0_i32 = arith.constant 0 : i32
    %c0_i32_0 = arith.constant 0 : i32
    %c0_i32_1 = arith.constant 0 : i32
    return %c0_i32, %c0_i32_0 : i32, i32
  }
  func.func @transform_4(%arg0: i32) -> (i32, i32) {
    %c0_i32 = arith.constant 0 : i32
    %c0_i32_0 = arith.constant 0 : i32
    %c0_i32_1 = arith.constant 0 : i32
    return %c0_i32, %c0_i32_0 : i32, i32
  }
  func.func @transform_5(%arg0: i32) -> (i32, i32) {
    %c0_i32 = arith.constant 0 : i32
    %c0_i32_0 = arith.constant 0 : i32
    %c0_i32_1 = arith.constant 0 : i32
    return %c0_i32, %c0_i32_0 : i32, i32
  }
  func.func @transform_6(%arg0: i32) -> (i32, i32) {
    %c0_i32 = arith.constant 0 : i32
    %c0_i32_0 = arith.constant 0 : i32
    %c0_i32_1 = arith.constant 0 : i32
    return %c0_i32, %c0_i32_0 : i32, i32
  }
  func.func @transform_7(%arg0: i32) -> (i32, i32) {
    %c0_i32 = arith.constant 0 : i32
    %c0_i32_0 = arith.constant 0 : i32
    return %arg0, %c0_i32 : i32, i32
  }
}

</mosaic_0001>

<llo_original>
// kernel: tpu_custom_call.1
$region0: #{tpu_custom_call.1}
  #allocation0 [shape = 'u32[]', space=smem, size = 0x4, offset = 0x4, fixed_abs, tag = 'smem constant byte address 0x4 - core index']
  #allocation1 [shape = 'u32[72,128]{1,0:T(1,128)}', space=vmem, size = 0x9000, scoped, tag = 'internal scratch']
  %s0 = inlined_call_operand.vmem [shape: f32[8,32], index: 0, kind: input, shape index: {}]
  %s1 = inlined_call_operand.hbm [shape: f32[32,128], index: 1, kind: input, shape index: {}]
  %s2 = inlined_call_operand.vmem [shape: f32[1,128], index: 2, kind: input, shape index: {}]
  %s3 = inlined_call_operand.vmem [shape: f32[128,128], index: 3, kind: input, shape index: {}]
  %s4 = inlined_call_operand.vmem [shape: f32[1,128], index: 4, kind: input, shape index: {}]
  %s5 = inlined_call_operand.vmem [shape: f32[128,8], index: 5, kind: input, shape index: {}]
  %s6 = inlined_call_operand.vmem [shape: f32[1,8], index: 6, kind: input, shape index: {}]
  %s7 = inlined_call_operand.hbm [shape: f32[8,8], index: 7, kind: output, shape index: {}]
  %s8 = sld [smem:[#allocation0]]
  $region42: #{tpu_custom_call.1} parent=0
    _
  %s10 = ssub.s32 1, %s8
  %s11 = scalar_select 0, %s10, %s8
  $region1: #{tpu_custom_call.1} parent=0
    #allocation2 [shape = 'u8[16384]{0}', space=vmem, size = 0x4000, scoped, tag = 'input window, operand 1, single buffered']
    #allocation3 [shape = 's32[1]{0}', space=sflag, size = 0x4, scoped, tag = 'scoped memory for tpu_custom_call.1']
    #allocation4 [shape = 's32[1]{0}', space=sflag, size = 0x4, scoped, tag = 'scoped memory for tpu_custom_call.1']
    #allocation5 [shape = 'u8[4096]{0}', space=vmem, size = 0x1000, scoped, tag = 'output window, operand 0, single buffered']
    %12 = vsyncpa [#allocation3], 0
    %13 = vsyncpa [#allocation4], 0
    // Predicated region
    $region2: #{tpu_custom_call.1} parent=1 // pred_check
      _
    $region3: #{tpu_custom_call.1} parent=1 // pred_check_branch
      %15 = sbr.rel (0) target = $region5
    $region4: #{tpu_custom_call.1} parent=1 // pred_region
      _
    $region5: #{tpu_custom_call.1} parent=1 // pred_fallthru
      _
    // Predicated region
    $region6: #{tpu_custom_call.1} parent=1 // pred_check
      _
    $region7: #{tpu_custom_call.1} parent=1 // pred_check_branch
      %17 = sbr.rel (0) target = $region9
    $region8: #{tpu_custom_call.1} parent=1 // pred_region
      %19 = vsyncadd [#allocation3], 0
      %s20 = sshll.u32 %s1, 4
      %s21 = int_to_ptr.hbm [resolvable:$true] %s20
      %s22 = sshll.u32 [#allocation2], 4
      %s23 = int_to_ptr.vmem [resolvable:$true] %s22
      %28 = dma.hbm_to_vmem [thread:$0]  %s21, 512, %s23, [#allocation3], 128, 128, 8
    $region9: #{tpu_custom_call.1} parent=1 // pred_fallthru
      _
    // Predicated region
    $region10: #{tpu_custom_call.1} parent=1 // pred_check
      _
    $region11: #{tpu_custom_call.1} parent=1 // pred_check_branch
      %30 = sbr.rel (0) target = $region13
    $region12: #{tpu_custom_call.1} parent=1 // pred_region
      _
    $region13: #{tpu_custom_call.1} parent=1 // pred_fallthru
      _
    // Predicated region
    $region14: #{tpu_custom_call.1} parent=1 // pred_check
      _
    $region15: #{tpu_custom_call.1} parent=1 // pred_check_branch
      %32 = sbr.rel (0) target = $region17
    $region16: #{tpu_custom_call.1} parent=1 // pred_region
      _
    $region17: #{tpu_custom_call.1} parent=1 // pred_fallthru
      _
    // Predicated region
    $region18: #{tpu_custom_call.1} parent=1 // pred_check
      _
    $region19: #{tpu_custom_call.1} parent=1 // pred_check_branch
      %34 = sbr.rel (0) target = $region21
    $region20: #{tpu_custom_call.1} parent=1 // pred_region
      _
    $region21: #{tpu_custom_call.1} parent=1 // pred_fallthru
      _
    // Predicated region
    $region22: #{tpu_custom_call.1} parent=1 // pred_check
      _
    $region23: #{tpu_custom_call.1} parent=1 // pred_check_branch
      %36 = sbr.rel (0) target = $region25
    $region24: #{tpu_custom_call.1} parent=1 // pred_region
      _
    $region25: #{tpu_custom_call.1} parent=1 // pred_fallthru
      _
    // Predicated region
    $region26: #{tpu_custom_call.1} parent=1 // pred_check
      _
    $region27: #{tpu_custom_call.1} parent=1 // pred_check_branch
      %38 = sbr.rel (0) target = $region29
    $region28: #{tpu_custom_call.1} parent=1 // pred_region
      _
    $region29: #{tpu_custom_call.1} parent=1 // pred_fallthru
      _
    // Predicated region
    $region30: #{tpu_custom_call.1} parent=1 // pred_check
      _
    $region31: #{tpu_custom_call.1} parent=1 // pred_check_branch
      %40 = sbr.rel (0) target = $region33
    $region32: #{tpu_custom_call.1} parent=1 // pred_region
      %42 = dma.done [#allocation3], 512
    $region33: #{tpu_custom_call.1} parent=1 // pred_fallthru
      _
    %v43 = vld [vmem:[%s0] sm:$0xff]
    %v44 = vld [vmem:[#allocation2] sm:$0xff]
    %v45 = vld [vmem:[#allocation2 + $0x8] sm:$0xff]
    %v46 = vld [vmem:[#allocation2 + $0x10] sm:$0xff]
    %v47 = vld [vmem:[#allocation2 + $0x18] sm:$0xff]
    %v48 = vld [vmem:[%s2] sm:$0x1]
    %v50 = vperm.slane %v48, 0
    %vm52 = vcmask 261120
    %v54 = vsel %vm52, %v43, 0
    %56 = vmatpush.msra.mxu0 0.0
    %57 = vmatpush.msra.mxu0 0.0
    %58 = vmatpush.msra.mxu0 0.0
    %59 = vmatpush.msra.mxu0 0.0
    %60 = vmatpush.msra.mxu0 0.0
    %61 = vmatpush.msra.mxu0 0.0
    %62 = vmatpush.msra.mxu0 0.0
    %63 = vmatpush.msra.mxu0 0.0
    %64 = vmatpush.msra.mxu0 0.0
    %65 = vmatpush.msra.mxu0 0.0
    %66 = vmatpush.msra.mxu0 0.0
    %67 = vmatpush.msra.mxu0 0.0
    %68 = vmatpush.msra.mxu0 %v47
    %69 = vmatpush.msra.mxu0 %v46
    %70 = vmatpush.msra.mxu0 %v45
    %71 = vmatpush.msra.mxu0 %v44
    %72 = vmatmul.f32.gmra.mxu0 %v54
    %v73 = vpop.f32.mrf.mxu0
    %v74 = vadd.f32 %v50, %v73
    %75 = vdwg.mxu0
    %v76 = vtanh.pop %v74
    %v77 = vld [vmem:[%s3] sm:$0xff]
    %v78 = vld [vmem:[%s3 + $0x8] sm:$0xff]
    %v79 = vld [vmem:[%s3 + $0x10] sm:$0xff]
    %v80 = vld [vmem:[%s3 + $0x18] sm:$0xff]
    %v81 = vld [vmem:[%s3 + $0x20] sm:$0xff]
    %v82 = vld [vmem:[%s3 + $0x28] sm:$0xff]
    %v83 = vld [vmem:[%s3 + $0x30] sm:$0xff]
    %v84 = vld [vmem:[%s3 + $0x38] sm:$0xff]
    %v85 = vld [vmem:[%s3 + $0x40] sm:$0xff]
    %v86 = vld [vmem:[%s3 + $0x48] sm:$0xff]
    %v87 = vld [vmem:[%s3 + $0x50] sm:$0xff]
    %v88 = vld [vmem:[%s3 + $0x58] sm:$0xff]
    %v89 = vld [vmem:[%s3 + $0x60] sm:$0xff]
    %v90 = vld [vmem:[%s3 + $0x68] sm:$0xff]
    %v91 = vld [vmem:[%s3 + $0x70] sm:$0xff]
    %v92 = vld [vmem:[%s3 + $0x78] sm:$0xff]
    %v93 = vld [vmem:[%s4] sm:$0x1]
    %v95 = vperm.slane %v93, 0
    %97 = vmatpush.msra.mxu0 %v92
    %98 = vmatpush.msra.mxu0 %v91
    %99 = vmatpush.msra.mxu0 %v90
    %100 = vmatpush.msra.mxu0 %v89
    %101 = vmatpush.msra.mxu0 %v88
    %102 = vmatpush.msra.mxu0 %v87
    %103 = vmatpush.msra.mxu0 %v86
    %104 = vmatpush.msra.mxu0 %v85
    %105 = vmatpush.msra.mxu0 %v84
    %106 = vmatpush.msra.mxu0 %v83
    %107 = vmatpush.msra.mxu0 %v82
    %108 = vmatpush.msra.mxu0 %v81
    %109 = vmatpush.msra.mxu0 %v80
    %110 = vmatpush.msra.mxu0 %v79
    %111 = vmatpush.msra.mxu0 %v78
    %112 = vmatpush.msra.mxu0 %v77
    %113 = vmatmul.f32.gmra.mxu0 %v76
    %v114 = vpop.f32.mrf.mxu0
    %v115 = vadd.f32 %v95, %v114
    %116 = vdwg.mxu0
    %v117 = vtanh.pop %v115
    %118 = vmatpush.msra.mxu0 %v92
    %119 = vmatpush.msra.mxu0 %v91
    %120 = vmatpush.msra.mxu0 %v90
    %121 = vmatpush.msra.mxu0 %v89
    %122 = vmatpush.msra.mxu0 %v88
    %123 = vmatpush.msra.mxu0 %v87
    %124 = vmatpush.msra.mxu0 %v86
    %125 = vmatpush.msra.mxu0 %v85
    %126 = vmatpush.msra.mxu0 %v84
    %127 = vmatpush.msra.mxu0 %v83
    %128 = vmatpush.msra.mxu0 %v82
    %129 = vmatpush.msra.mxu0 %v81
    %130 = vmatpush.msra.mxu0 %v80
    %131 = vmatpush.msra.mxu0 %v79
    %132 = vmatpush.msra.mxu0 %v78
    %133 = vmatpush.msra.mxu0 %v77
    %134 = vmatmul.f32.gmra.mxu0 %v117
    %v135 = vpop.f32.mrf.mxu0
    %v136 = vadd.f32 %v95, %v135
    %137 = vdwg.mxu0
    %v138 = vtanh.pop %v136
    %v139 = vld [vmem:[%s5] sm:$0xff]
    %v140 = vld [vmem:[%s5 + $0x8] sm:$0xff]
    %v141 = vld [vmem:[%s5 + $0x10] sm:$0xff]
    %v142 = vld [vmem:[%s5 + $0x18] sm:$0xff]
    %v143 = vld [vmem:[%s5 + $0x20] sm:$0xff]
    %v144 = vld [vmem:[%s5 + $0x28] sm:$0xff]
    %v145 = vld [vmem:[%s5 + $0x30] sm:$0xff]
    %v146 = vld [vmem:[%s5 + $0x38] sm:$0xff]
    %v147 = vld [vmem:[%s5 + $0x40] sm:$0xff]
    %v148 = vld [vmem:[%s5 + $0x48] sm:$0xff]
    %v149 = vld [vmem:[%s5 + $0x50] sm:$0xff]
    %v150 = vld [vmem:[%s5 + $0x58] sm:$0xff]
    %v151 = vld [vmem:[%s5 + $0x60] sm:$0xff]
    %v152 = vld [vmem:[%s5 + $0x68] sm:$0xff]
    %v153 = vld [vmem:[%s5 + $0x70] sm:$0xff]
    %v154 = vld [vmem:[%s5 + $0x78] sm:$0xff]
    %v155 = vld [vmem:[%s6] sm:$0x1]
    %v157 = vperm.slane %v155, 0
    %159 = vmatpush.msra.mxu0 %v154
    %160 = vmatpush.msra.mxu0 %v153
    %161 = vmatpush.msra.mxu0 %v152
    %162 = vmatpush.msra.mxu0 %v151
    %163 = vmatpush.msra.mxu0 %v150
    %164 = vmatpush.msra.mxu0 %v149
    %165 = vmatpush.msra.mxu0 %v148
    %166 = vmatpush.msra.mxu0 %v147
    %167 = vmatpush.msra.mxu0 %v146
    %168 = vmatpush.msra.mxu0 %v145
    %169 = vmatpush.msra.mxu0 %v144
    %170 = vmatpush.msra.mxu0 %v143
    %171 = vmatpush.msra.mxu0 %v142
    %172 = vmatpush.msra.mxu0 %v141
    %173 = vmatpush.msra.mxu0 %v140
    %174 = vmatpush.msra.mxu0 %v139
    %175 = vmatmul.f32.gmra.mxu0 %v138
    %v176 = vpop.f32.mrf.mxu0
    %v177 = vadd.f32 %v157, %v176
    %178 = vdwg.mxu0
    %vm179 = vcmask 64512
    %180 = vst.msk [vmem:[#allocation5] sm:$0xff] %vm179, %v177
    // Predicated region
    $region34: #{tpu_custom_call.1} parent=1 // pred_check
      _
    $region35: #{tpu_custom_call.1} parent=1 // pred_check_branch
      %182 = sbr.rel (0) target = $region37
    $region36: #{tpu_custom_call.1} parent=1 // pred_region
      %184 = vsyncadd [#allocation4], 0
      %s186 = sshll.u32 [#allocation5], 4
      %s187 = int_to_ptr.vmem [resolvable:$true] %s186
      %s188 = sshll.u32 %s7, 4
      %s189 = int_to_ptr.hbm [resolvable:$true] %s188
      %191 = dma.vmem_to_hbm [thread:$0]  %s187, 128, %s189, [#allocation4]
    $region37: #{tpu_custom_call.1} parent=1 // pred_fallthru
      _
    // Predicated region
    $region38: #{tpu_custom_call.1} parent=1 // pred_check
      _
    $region39: #{tpu_custom_call.1} parent=1 // pred_check_branch
      %193 = sbr.rel (0) target = $region41
    $region40: #{tpu_custom_call.1} parent=1 // pred_region
      %195 = dma.done [#allocation4], 128
    $region41: #{tpu_custom_call.1} parent=1 // pred_fallthru
      _
    %196 = vsyncpa [#allocation3], 1
    %197 = vsyncpa [#allocation4], 1

</llo_original>
